<compile_context>
chip_gen: v5e
topology: v5e:2x2
jax: 0.10.0
libtpu: 0.0.40
codegen_flags: <defaults>
</compile_context>

<pallas_src>
import functools
import numpy as np
import jax
import jax.numpy as jnp
from jax import lax
from jax.experimental import pallas as pl
from jax.experimental.pallas import tpu as pltpu


# ---------------------------------------------------------------------------
# Kernels
# ---------------------------------------------------------------------------

def _pixelnorm(x, eps):
    return x * lax.rsqrt(jnp.mean(x * x, axis=-1, keepdims=True) + eps)


def _leaky_relu(y, neg_slope):
    # vmul + vmax instead of vmul + vcmp + vselect.
    return jnp.maximum(y, neg_slope * y)


def gmapping_resident_kernel(x_ref, w_ref, b_ref, o_ref, *,
                             num_layers, neg_slope, eps):
    """Grid = (batch_tiles,). All L weight matrices resident in VMEM.

    x_ref: (tb, F)        f32 latent tile
    w_ref: (L, F_in, F_out) bf16, pre-transposed, w_mul folded in
    b_ref: (L, F_out)     f32, b_mul folded in
    """
    h = _pixelnorm(x_ref[...].astype(jnp.float32), eps)
    for l in range(num_layers):                        # static unroll (L small)
        y = lax.dot_general(h.astype(jnp.bfloat16), w_ref[l],
                            (((1,), (0,)), ((), ())),   # (M,K)x(K,N), no transpose
                            preferred_element_type=jnp.float32)
        y = y + b_ref[pl.ds(l, 1), :]                  # (1, F_out) broadcast
        h = _leaky_relu(y, neg_slope)
    o_ref[...] = h.astype(o_ref.dtype)


def gmapping_layer_kernel(x_ref, w_ref, b_ref, o_ref, h_ref, *,
                          neg_slope, eps):
    """Grid = (batch_tiles, L), layer axis 'arbitrary'.

    One layer's weights are DMA'd per grid step (double-buffered by the Pallas
    pipeline, overlapping with the previous layer's matmul). The activation is
    carried in the f32 VMEM scratch `h_ref`.

    x_ref: (tb, F)          f32 latent tile (same block across l -> no re-DMA)
    w_ref: (1, F_in, F_out) bf16 weights of layer l
    b_ref: (L, F_out)       f32 biases (tiny, fully resident)
    """
    l = pl.program_id(1)

    @pl.when(l == 0)
    def _():
        h_ref[...] = _pixelnorm(x_ref[...].astype(jnp.float32), eps)

    y = lax.dot_general(h_ref[...].astype(jnp.bfloat16), w_ref[0],
                        (((1,), (0,)), ((), ())),
                        preferred_element_type=jnp.float32)
    y = y + b_ref[pl.ds(l, 1), :]
    h_ref[...] = _leaky_relu(y, neg_slope)

    @pl.when(l == pl.num_programs(1) - 1)
    def _():
        o_ref[...] = h_ref[...].astype(o_ref.dtype)


# ---------------------------------------------------------------------------
# Wrapper
# ---------------------------------------------------------------------------

def _tpu_generation_params():
    """Best-effort (batch-tile row cap, min grid steps) per TPU generation."""
    cap, min_steps = 256, 1                        # conservative (v5e-like)
    try:
        kind = jax.devices()[0].device_kind.lower()
    except Exception:                              # probe only; defaults are safe
        return cap, min_steps
    if "v7" in kind:
        cap, min_steps = 512, 2                    # 2 TensorCores per chip
    elif "v6" in kind:
        cap, min_steps = 512, 1
    return cap, min_steps


def _choose_tiling(batch, cap, min_steps):
    """Balanced tiles: pick tb from the step count so padding stays < 8 rows/tile."""
    b8 = max(8, ((batch + 7) // 8) * 8)
    steps = max(min_steps if batch >= 16 else 1, pl.cdiv(b8, cap))
    tb = ((pl.cdiv(b8, steps) + 7) // 8) * 8
    steps = pl.cdiv(b8, tb)
    return tb, steps


def gmapping_forward(x, weights, biases, *,
                     lrmul=0.01, gain=float(np.sqrt(2)),
                     dlatent_broadcast=None, variant="auto", tb=None):
    """StyleGAN GMapping forward.

    x:       (B, F) latents
    weights: (L, F_out, F_in) stacked EqualizedLinear weights (PyTorch layout)
    biases:  (L, F_out) or (L, 1, F_out) stacked biases
    Precision: weights/activations fed to the MXU in bf16, f32 accumulation and
    f32 pixelnorm / LeakyReLU (explicit choice; see bf16 mirror reference).
    """
    B, F_in = x.shape
    L, F_out, fan_in = weights.shape
    assert F_in == fan_in and F_out == fan_in, \
        "stacked-weight kernel assumes latent_size == mapping_fmaps == dlatent_size"

    # EqualizedLinear runtime multipliers (use_wscale=True), folded ONCE into
    # the weights/biases outside the kernel (zero per-step cost).
    w_mul = gain / np.sqrt(fan_in) * lrmul
    b_mul = lrmul
    w_t = (jnp.transpose(weights, (0, 2, 1)).astype(jnp.float32)
           * jnp.float32(w_mul)).astype(jnp.bfloat16)            # (L, F_in, F_out)
    b_s = (jnp.reshape(biases, (L, F_out)).astype(jnp.float32)
           * jnp.float32(b_mul))                                  # (L, F_out)

    cap, min_steps = _tpu_generation_params()
    if tb is None:
        tb, steps = _choose_tiling(B, cap, min_steps)
    else:
        tb = max(8, (int(tb) // 8) * 8)
        steps = pl.cdiv(B, tb)
    B_pad = steps * tb

    x_p = x.astype(jnp.float32)
    if B_pad != B:
        x_p = jnp.pad(x_p, ((0, B_pad - B), (0, 0)))

    if variant == "auto":
        # Few batch tiles (weight prologue not amortized) or large F (VMEM)
        # -> layer-blocked weight pipelining; otherwise keep weights resident.
        variant = "layer_blocked" if (steps <= 2 or F_in >= 1024) else "resident"

    # Explicit VMEM budget (double-buffered I/O blocks) -> raise scoped limit
    # only when it matters; stays under v7x's 64 MiB physical per core.
    tile_io = 2 * (tb * F_in * 4) + 2 * (tb * F_out * 4) + 2 * (L * F_out * 4)
    if variant == "resident":
        budget = tile_io + 2 * (L * F_in * F_out * 2)
    else:
        budget = tile_io + 2 * (F_in * F_out * 2) + tb * F_out * 4
    compiler_kwargs = {}
    if budget > 12 * 1024 * 1024:
        compiler_kwargs["vmem_limit_bytes"] = int(
            min(budget + 8 * 1024 * 1024, 48 * 1024 * 1024))

    if variant == "resident":
        kernel = functools.partial(gmapping_resident_kernel,
                                   num_layers=L, neg_slope=0.2, eps=1e-8)
        out = pl.pallas_call(
            kernel,
            out_shape=jax.ShapeDtypeStruct((B_pad, F_out), jnp.float32),
            grid_spec=pltpu.PrefetchScalarGridSpec(
                num_scalar_prefetch=0,
                grid=(steps,),
                in_specs=[
                    pl.BlockSpec((tb, F_in), lambda i: (i, 0)),           # latents
                    pl.BlockSpec((L, F_in, F_out), lambda i: (0, 0, 0)),  # weights resident
                    pl.BlockSpec((L, F_out), lambda i: (0, 0)),           # biases resident
                ],
                out_specs=pl.BlockSpec((tb, F_out), lambda i: (i, 0)),
            ),
            compiler_params=pltpu.CompilerParams(
                dimension_semantics=("parallel",), **compiler_kwargs),
        )(x_p, w_t, b_s)
    else:  # layer_blocked
        kernel = functools.partial(gmapping_layer_kernel, neg_slope=0.2, eps=1e-8)
        out = pl.pallas_call(
            kernel,
            out_shape=jax.ShapeDtypeStruct((B_pad, F_out), jnp.float32),
            grid_spec=pltpu.PrefetchScalarGridSpec(
                num_scalar_prefetch=0,
                grid=(steps, L),
                in_specs=[
                    pl.BlockSpec((tb, F_in), lambda i, l: (i, 0)),            # latents (no re-DMA across l)
                    pl.BlockSpec((1, F_in, F_out), lambda i, l: (l, 0, 0)),   # one layer per step
                    pl.BlockSpec((L, F_out), lambda i, l: (0, 0)),            # biases resident (tiny)
                ],
                out_specs=pl.BlockSpec((tb, F_out), lambda i, l: (i, 0)),
                scratch_shapes=[pltpu.VMEM((tb, F_out), jnp.float32)],        # activation carry
            ),
            compiler_params=pltpu.CompilerParams(
                dimension_semantics=("parallel", "arbitrary"), **compiler_kwargs),
        )(x_p, w_t, b_s)

    if B_pad != B:
        out = out[:B]
    if dlatent_broadcast is not None:
        # Module default is None; broadcast (pure view/expand) done in the wrapper.
        out = jnp.broadcast_to(out[:, None, :], (B, dlatent_broadcast, F_out))
    return out


# ---------------------------------------------------------------------------
# References
# ---------------------------------------------------------------------------

def gmapping_reference_f32(x, weights, biases, *, lrmul=0.01, gain=float(np.sqrt(2))):
    """Pure-f32 JAX mirror of the PyTorch module."""
    L, F_out, fan_in = weights.shape
    w_mul = gain / np.sqrt(fan_in) * lrmul
    b_mul = lrmul
    b2 = jnp.reshape(biases, (L, F_out)).astype(jnp.float32)
    h = x.astype(jnp.float32)
    h = h * lax.rsqrt(jnp.mean(h * h, axis=-1, keepdims=True) + 1e-8)
    for l in range(L):
        w = weights[l].astype(jnp.float32) * w_mul
        y = h @ w.T + b2[l] * b_mul
        h = jnp.maximum(y, 0.2 * y)
    return h


def gmapping_reference_bf16(x, weights, biases, *, lrmul=0.01, gain=float(np.sqrt(2))):
    """Mirror of the kernel's math (scale folded into bf16 weights, f32 accum)."""
    L, F_out, fan_in = weights.shape
    w_mul = gain / np.sqrt(fan_in) * lrmul
    b_mul = lrmul
    w_t = (jnp.transpose(weights, (0, 2, 1)).astype(jnp.float32)
           * jnp.float32(w_mul)).astype(jnp.bfloat16)
    b_s = jnp.reshape(biases, (L, F_out)).astype(jnp.float32) * jnp.float32(b_mul)
    h = x.astype(jnp.float32)
    h = h * lax.rsqrt(jnp.mean(h * h, axis=-1, keepdims=True) + 1e-8)
    for l in range(L):
        y = jnp.dot(h.astype(jnp.bfloat16), w_t[l],
                    preferred_element_type=jnp.float32) + b_s[l]
        h = jnp.maximum(y, 0.2 * y)
    return h


# ---------------------------------------------------------------------------
# Demo / self-test
# ---------------------------------------------------------------------------

if __name__ == "__main__":
    # Small shapes consistent with the module (latent == fmaps == dlatent).
    latent_size = 128        # stands in for 512
    mapping_layers = 4       # stands in for 8
    lrmul = 0.01

    key = jax.random.PRNGKey(0)
    kx, kw, kb, kx2 = jax.random.split(key, 4)

    # EqualizedLinearPropia init: weight ~ N(0,1) * (1/lrmul). Biases are zeros
    # at init; use small random biases here so the b_mul path is exercised.
    init_std = 1.0 / lrmul
    weights = (jax.random.normal(
        kw, (mapping_layers, latent_size, latent_size), dtype=jnp.float32) * init_std)
    biases = jax.random.normal(
        kb, (mapping_layers, latent_size), dtype=jnp.float32) * 0.1

    def check(x_in, **kwargs):
        out = jax.block_until_ready(gmapping_forward(x_in, weights, biases,
                                                     lrmul=lrmul, **kwargs))
        ref_bf16 = gmapping_reference_bf16(x_in, weights, biases, lrmul=lrmul)
        ref_f32 = gmapping_reference_f32(x_in, weights, biases, lrmul=lrmul)
        np.testing.assert_allclose(np.asarray(out), np.asarray(ref_bf16),
                                   rtol=1e-2, atol=1e-2)        # mirror of kernel math
        np.testing.assert_allclose(np.asarray(out), np.asarray(ref_f32),
                                   rtol=1e-1, atol=1e-1)        # bf16 quantization slack
        return out

    # Both kernel variants at a tiny batch, plus the auto path with an
    # unaligned batch (exercises padding + balanced tiling).
    x_small = jax.random.normal(kx, (8, latent_size), dtype=jnp.float32)
    check(x_small, variant="resident")
    check(x_small, variant="layer_blocked")

    x_ragged = jax.random.normal(kx2, (20, latent_size), dtype=jnp.float32)
    check(x_ragged, variant="auto")

    print("KERNEL_OK")
</pallas_src>

<mosaic_0001>
module attributes {stable_mosaic.version = 11 : i64} {
  func.func @gmapping_resident_kernel(%arg0: i32, %arg1: memref<8x128xf32, #tpu.memory_space<vmem>>, %arg2: memref<4x128x128xbf16, #tpu.memory_space<vmem>>, %arg3: memref<4x128xf32, #tpu.memory_space<vmem>>, %arg4: memref<8x128xf32, #tpu.memory_space<vmem>>) attributes {dimension_semantics = [#tpu.dimension_semantics<parallel>], iteration_bounds = array<i64: 1>, scalar_prefetch = 0 : i64, scratch_operands = 0 : i64, tpu.core_type = #tpu.core_type<tc>, window_params = [{transform_indices = @transform_0, window_bounds = array<i64: 8, 128>}, {pipeline_mode = #tpu.pipeline_mode<synchronous>, transform_indices = @transform_1, window_bounds = array<i64: 4, 128, 128>}, {pipeline_mode = #tpu.pipeline_mode<synchronous>, transform_indices = @transform_2, window_bounds = array<i64: 4, 128>}, {transform_indices = @transform_3, window_bounds = array<i64: 8, 128>}]} {
    %c0 = arith.constant 0 : index
    %c0_0 = arith.constant 0 : index
    %0 = vector.load %arg1[%c0, %c0_0] : memref<8x128xf32, #tpu.memory_space<vmem>>, vector<8x128xf32>
    %1 = arith.mulf %0, %0 : vector<8x128xf32>
    %cst = arith.constant dense<0.000000e+00> : vector<8xf32>
    %2 = vector.multi_reduction <add>, %1, %cst [1] : vector<8x128xf32> to vector<8xf32>
    %3 = vector.shape_cast %2 : vector<8xf32> to vector<8x1xf32>
    %cst_1 = arith.constant 1.280000e+02 : f32
    %4 = vector.broadcast %cst_1 : f32 to vector<8x1xf32>
    %5 = arith.divf %3, %4 : vector<8x1xf32>
    %cst_2 = arith.constant 9.99999993E-9 : f32
    %6 = vector.broadcast %cst_2 : f32 to vector<8x1xf32>
    %7 = arith.addf %5, %6 : vector<8x1xf32>
    %8 = math.rsqrt %7 : vector<8x1xf32>
    %9 = vector.broadcast %8 : vector<8x1xf32> to vector<8x128xf32>
    %10 = arith.mulf %0, %9 : vector<8x128xf32>
    %11 = arith.truncf %10 : vector<8x128xf32> to vector<8x128xbf16>
    %c0_3 = arith.constant 0 : index
    %c0_4 = arith.constant 0 : index
    %c0_5 = arith.constant 0 : index
    %12 = vector.load %arg2[%c0_3, %c0_4, %c0_5] : memref<4x128x128xbf16, #tpu.memory_space<vmem>>, vector<1x128x128xbf16>
    %13 = vector.shape_cast %12 : vector<1x128x128xbf16> to vector<128x128xbf16>
    %cst_6 = arith.constant dense<0.000000e+00> : vector<8x128xf32>
    %14 = tpu.matmul %11, %13, %cst_6 {dimension_numbers = #tpu.dot_dimension_numbers<[1], [0], [0], [1], [0, 0, 1, 1], [], []>} : vector<8x128xbf16>, vector<128x128xbf16>, vector<8x128xf32> -> vector<8x128xf32>
    %c0_7 = arith.constant 0 : index
    %c0_8 = arith.constant 0 : index
    %15 = vector.load %arg3[%c0_7, %c0_8] : memref<4x128xf32, #tpu.memory_space<vmem>>, vector<1x128xf32>
    %16 = vector.broadcast %15 : vector<1x128xf32> to vector<8x128xf32>
    %17 = arith.addf %14, %16 : vector<8x128xf32>
    %cst_9 = arith.constant 2.000000e-01 : f32
    %18 = vector.broadcast %cst_9 : f32 to vector<8x128xf32>
    %19 = arith.mulf %18, %17 : vector<8x128xf32>
    %20 = arith.maximumf %17, %19 : vector<8x128xf32>
    %21 = arith.truncf %20 : vector<8x128xf32> to vector<8x128xbf16>
    %c1 = arith.constant 1 : index
    %c0_10 = arith.constant 0 : index
    %c0_11 = arith.constant 0 : index
    %22 = vector.load %arg2[%c1, %c0_10, %c0_11] : memref<4x128x128xbf16, #tpu.memory_space<vmem>>, vector<1x128x128xbf16>
    %23 = vector.shape_cast %22 : vector<1x128x128xbf16> to vector<128x128xbf16>
    %cst_12 = arith.constant dense<0.000000e+00> : vector<8x128xf32>
    %24 = tpu.matmul %21, %23, %cst_12 {dimension_numbers = #tpu.dot_dimension_numbers<[1], [0], [0], [1], [0, 0, 1, 1], [], []>} : vector<8x128xbf16>, vector<128x128xbf16>, vector<8x128xf32> -> vector<8x128xf32>
    %c1_13 = arith.constant 1 : index
    %c0_14 = arith.constant 0 : index
    %25 = vector.load %arg3[%c1_13, %c0_14] : memref<4x128xf32, #tpu.memory_space<vmem>>, vector<1x128xf32>
    %26 = vector.broadcast %25 : vector<1x128xf32> to vector<8x128xf32>
    %27 = arith.addf %24, %26 : vector<8x128xf32>
    %cst_15 = arith.constant 2.000000e-01 : f32
    %28 = vector.broadcast %cst_15 : f32 to vector<8x128xf32>
    %29 = arith.mulf %28, %27 : vector<8x128xf32>
    %30 = arith.maximumf %27, %29 : vector<8x128xf32>
    %31 = arith.truncf %30 : vector<8x128xf32> to vector<8x128xbf16>
    %c2 = arith.constant 2 : index
    %c0_16 = arith.constant 0 : index
    %c0_17 = arith.constant 0 : index
    %32 = vector.load %arg2[%c2, %c0_16, %c0_17] : memref<4x128x128xbf16, #tpu.memory_space<vmem>>, vector<1x128x128xbf16>
    %33 = vector.shape_cast %32 : vector<1x128x128xbf16> to vector<128x128xbf16>
    %cst_18 = arith.constant dense<0.000000e+00> : vector<8x128xf32>
    %34 = tpu.matmul %31, %33, %cst_18 {dimension_numbers = #tpu.dot_dimension_numbers<[1], [0], [0], [1], [0, 0, 1, 1], [], []>} : vector<8x128xbf16>, vector<128x128xbf16>, vector<8x128xf32> -> vector<8x128xf32>
    %c2_19 = arith.constant 2 : index
    %c0_20 = arith.constant 0 : index
    %35 = vector.load %arg3[%c2_19, %c0_20] : memref<4x128xf32, #tpu.memory_space<vmem>>, vector<1x128xf32>
    %36 = vector.broadcast %35 : vector<1x128xf32> to vector<8x128xf32>
    %37 = arith.addf %34, %36 : vector<8x128xf32>
    %cst_21 = arith.constant 2.000000e-01 : f32
    %38 = vector.broadcast %cst_21 : f32 to vector<8x128xf32>
    %39 = arith.mulf %38, %37 : vector<8x128xf32>
    %40 = arith.maximumf %37, %39 : vector<8x128xf32>
    %41 = arith.truncf %40 : vector<8x128xf32> to vector<8x128xbf16>
    %c3 = arith.constant 3 : index
    %c0_22 = arith.constant 0 : index
    %c0_23 = arith.constant 0 : index
    %42 = vector.load %arg2[%c3, %c0_22, %c0_23] : memref<4x128x128xbf16, #tpu.memory_space<vmem>>, vector<1x128x128xbf16>
    %43 = vector.shape_cast %42 : vector<1x128x128xbf16> to vector<128x128xbf16>
    %cst_24 = arith.constant dense<0.000000e+00> : vector<8x128xf32>
    %44 = tpu.matmul %41, %43, %cst_24 {dimension_numbers = #tpu.dot_dimension_numbers<[1], [0], [0], [1], [0, 0, 1, 1], [], []>} : vector<8x128xbf16>, vector<128x128xbf16>, vector<8x128xf32> -> vector<8x128xf32>
    %c3_25 = arith.constant 3 : index
    %c0_26 = arith.constant 0 : index
    %45 = vector.load %arg3[%c3_25, %c0_26] : memref<4x128xf32, #tpu.memory_space<vmem>>, vector<1x128xf32>
    %46 = vector.broadcast %45 : vector<1x128xf32> to vector<8x128xf32>
    %47 = arith.addf %44, %46 : vector<8x128xf32>
    %cst_27 = arith.constant 2.000000e-01 : f32
    %48 = vector.broadcast %cst_27 : f32 to vector<8x128xf32>
    %49 = arith.mulf %48, %47 : vector<8x128xf32>
    %50 = arith.maximumf %47, %49 : vector<8x128xf32>
    %c0_28 = arith.constant 0 : index
    %c0_29 = arith.constant 0 : index
    %51 = vector.load %arg4[%c0_28, %c0_29] : memref<8x128xf32, #tpu.memory_space<vmem>>, vector<8x128xf32>
    tpu.vector_store %arg4[%c0_28, %c0_29], %50 {strides = array<i32>} : memref<8x128xf32, #tpu.memory_space<vmem>>, vector<8x128xf32>,
    return
  }
  func.func @transform_0(%arg0: i32) -> (i32, i32) {
    %c0_i32 = arith.constant 0 : i32
    %c0_i32_0 = arith.constant 0 : i32
    return %arg0, %c0_i32 : i32, i32
  }
  func.func @transform_1(%arg0: i32) -> (i32, i32, i32) {
    %c0_i32 = arith.constant 0 : i32
    %c0_i32_0 = arith.constant 0 : i32
    %c0_i32_1 = arith.constant 0 : i32
    %c0_i32_2 = arith.constant 0 : i32
    return %c0_i32, %c0_i32_0, %c0_i32_1 : i32, i32, i32
  }
  func.func @transform_2(%arg0: i32) -> (i32, i32) {
    %c0_i32 = arith.constant 0 : i32
    %c0_i32_0 = arith.constant 0 : i32
    %c0_i32_1 = arith.constant 0 : i32
    return %c0_i32, %c0_i32_0 : i32, i32
  }
  func.func @transform_3(%arg0: i32) -> (i32, i32) {
    %c0_i32 = arith.constant 0 : i32
    %c0_i32_0 = arith.constant 0 : i32
    return %arg0, %c0_i32 : i32, i32
  }
}

</mosaic_0001>

<llo_original>
// kernel: tpu_custom_call.1
$region0: #{tpu_custom_call.1}
  #allocation0 [shape = 'u32[]', space=smem, size = 0x4, offset = 0x4, fixed_abs, tag = 'smem constant byte address 0x4 - core index']
  #allocation1 [shape = 'u32[72,128]{1,0:T(1,128)}', space=vmem, size = 0x9000, scoped, tag = 'internal scratch']
  %s0 = inlined_call_operand.hbm [shape: f32[8,128], index: 0, kind: input, shape index: {}]
  %s1 = inlined_call_operand.hbm [shape: bf16[4,128,128], index: 1, kind: input, shape index: {}]
  %s2 = inlined_call_operand.hbm [shape: f32[4,128], index: 2, kind: input, shape index: {}]
  %s3 = inlined_call_operand.hbm [shape: f32[8,128], index: 3, kind: output, shape index: {}]
  %s4 = sld [smem:[#allocation0]]
  $region34: #{tpu_custom_call.1} parent=0
    _
  %s6 = ssub.s32 1, %s4
  %s7 = scalar_select 0, %s6, %s4
  $region1: #{tpu_custom_call.1} parent=0
    #allocation2 [shape = 'u8[4096]{0}', space=vmem, size = 0x1000, scoped, tag = 'input window, operand 0, single buffered']
    #allocation3 [shape = 's32[1]{0}', space=sflag, size = 0x4, scoped, tag = 'scoped memory for tpu_custom_call.1']
    #allocation4 [shape = 's32[1]{0}', space=sflag, size = 0x4, scoped, tag = 'scoped memory for tpu_custom_call.1']
    #allocation5 [shape = 'u8[131072]{0}', space=vmem, size = 0x20000, scoped, tag = 'input window, operand 1, single buffered']
    #allocation6 [shape = 's32[1]{0}', space=sflag, size = 0x4, scoped, tag = 'scoped memory for tpu_custom_call.1']
    #allocation7 [shape = 'u8[2048]{0}', space=vmem, size = 0x800, scoped, tag = 'input window, operand 2, single buffered']
    #allocation8 [shape = 'u8[4096]{0}', space=vmem, size = 0x1000, scoped, tag = 'output window, operand 0, single buffered']
    %8 = vsyncpa [#allocation3], 0
    %9 = vsyncpa [#allocation6], 0
    %10 = vsyncpa [#allocation4], 0
    // Predicated region
    $region2: #{tpu_custom_call.1} parent=1 // pred_check
      _
    $region3: #{tpu_custom_call.1} parent=1 // pred_check_branch
      %12 = sbr.rel (0) target = $region5
    $region4: #{tpu_custom_call.1} parent=1 // pred_region
      %14 = vsyncadd [#allocation3], 0
      %s16 = sshll.u32 %s0, 4
      %s17 = int_to_ptr.hbm [resolvable:$true] %s16
      %s18 = sshll.u32 [#allocation2], 4
      %s19 = int_to_ptr.vmem [resolvable:$true] %s18
      %21 = dma.hbm_to_vmem [thread:$0]  %s17, 128, %s19, [#allocation3]
    $region5: #{tpu_custom_call.1} parent=1 // pred_fallthru
      _
    // Predicated region
    $region6: #{tpu_custom_call.1} parent=1 // pred_check
      _
    $region7: #{tpu_custom_call.1} parent=1 // pred_check_branch
      %23 = sbr.rel (0) target = $region9
    $region8: #{tpu_custom_call.1} parent=1 // pred_region
      %25 = vsyncadd [#allocation6], 0
      %s26 = sshll.u32 %s1, 4
      %s27 = int_to_ptr.hbm [resolvable:$true] %s26
      %s28 = sshll.u32 [#allocation5], 4
      %s29 = int_to_ptr.vmem [resolvable:$true] %s28
      %34 = dma.hbm_to_vmem [thread:$0]  %s27, 4096, %s29, [#allocation6], 64, 64, 4
    $region9: #{tpu_custom_call.1} parent=1 // pred_fallthru
      _
    // Predicated region
    $region10: #{tpu_custom_call.1} parent=1 // pred_check
      _
    $region11: #{tpu_custom_call.1} parent=1 // pred_check_branch
      %36 = sbr.rel (0) target = $region13
    $region12: #{tpu_custom_call.1} parent=1 // pred_region
      %38 = vsyncadd [#allocation6], 0
      %s40 = sshll.u32 %s2, 4
      %s41 = int_to_ptr.hbm [resolvable:$true] %s40
      %s42 = sshll.u32 [#allocation7], 4
      %s43 = int_to_ptr.vmem [resolvable:$true] %s42
      %45 = dma.hbm_to_vmem [thread:$0]  %s41, 64, %s43, [#allocation6]
    $region13: #{tpu_custom_call.1} parent=1 // pred_fallthru
      _
    // Predicated region
    $region14: #{tpu_custom_call.1} parent=1 // pred_check
      _
    $region15: #{tpu_custom_call.1} parent=1 // pred_check_branch
      %47 = sbr.rel (0) target = $region17
    $region16: #{tpu_custom_call.1} parent=1 // pred_region
      %49 = dma.done [#allocation3], 128
    $region17: #{tpu_custom_call.1} parent=1 // pred_fallthru
      _
    // Predicated region
    $region18: #{tpu_custom_call.1} parent=1 // pred_check
      _
    $region19: #{tpu_custom_call.1} parent=1 // pred_check_branch
      %51 = sbr.rel (0) target = $region21
    $region20: #{tpu_custom_call.1} parent=1 // pred_region
      %53 = dma.done [#allocation6], 4096
    $region21: #{tpu_custom_call.1} parent=1 // pred_fallthru
      _
    // Predicated region
    $region22: #{tpu_custom_call.1} parent=1 // pred_check
      _
    $region23: #{tpu_custom_call.1} parent=1 // pred_check_branch
      %55 = sbr.rel (0) target = $region25
    $region24: #{tpu_custom_call.1} parent=1 // pred_region
      %57 = dma.done [#allocation6], 64
    $region25: #{tpu_custom_call.1} parent=1 // pred_fallthru
      _
    %v58 = vld [vmem:[#allocation2] sm:$0xff]
    %v59 = vmul.f32 %v58, %v58
    %60 = vadd.xlane.f32.xlu0 %v59
    %v61 = vpop.xlane.xlu0 %60
    %v62 = vrcp.pop 128.0
    %v63 = vmul.f32 128.0, %v62
    %v64 = vsub.f32 1.0, %v63
    %v65 = vmul.f32 %v62, %v64
    %v66 = vadd.f32 %v62, %v65
    %vm67 = vweird.f32 %v62
    %v68 = vsel %vm67, %v62, %v66
    %v69 = vmul.f32 %v61, %v68
    %v70 = vadd.f32 %v69, 1e-08
    %v71 = vrsqrt.pop %v70
    %v72 = vmul.f32 %v71, %v70
    %v73 = vmul.f32 %v72, %v71
    %v74 = vmul.f32 0.5, %v73
    %v75 = vsub.f32 1.5, %v74
    %v76 = vmul.f32 %v71, %v75
    %vm77 = vweird.f32 %v70
    %vm78 = vweird.f32 %v71
    %vm79 = vmor %vm77, %vm78
    %v80 = vsel %vm79, %v71, %v76
    %v81 = vmul.f32 %v58, %v80
    %v82 = vpack.c.bf16 %v81, %v81
    %v83 = vld [vmem:[#allocation5] sm:$0xf]
    %v84 = vld [vmem:[#allocation5 + $0x4] sm:$0xf]
    %v85 = vld [vmem:[#allocation5 + $0x8] sm:$0xf]
    %v86 = vld [vmem:[#allocation5 + $0xc] sm:$0xf]
    %v87 = vld [vmem:[#allocation5 + $0x10] sm:$0xf]
    %v88 = vld [vmem:[#allocation5 + $0x14] sm:$0xf]
    %v89 = vld [vmem:[#allocation5 + $0x18] sm:$0xf]
    %v90 = vld [vmem:[#allocation5 + $0x1c] sm:$0xf]
    %v91 = vld [vmem:[#allocation5 + $0x20] sm:$0xf]
    %v92 = vld [vmem:[#allocation5 + $0x24] sm:$0xf]
    %v93 = vld [vmem:[#allocation5 + $0x28] sm:$0xf]
    %v94 = vld [vmem:[#allocation5 + $0x2c] sm:$0xf]
    %v95 = vld [vmem:[#allocation5 + $0x30] sm:$0xf]
    %v96 = vld [vmem:[#allocation5 + $0x34] sm:$0xf]
    %v97 = vld [vmem:[#allocation5 + $0x38] sm:$0xf]
    %v98 = vld [vmem:[#allocation5 + $0x3c] sm:$0xf]
    %v99 = vld [vmem:[#allocation7] sm:$0x1]
    %v100 = vperm.slane %v99, 0
    %v117 = vunpack.c.l.b16 %v83
    %v118 = vunpack.c.l.b16 %v84
    %v119 = vunpack.c.l.b16 %v85
    %v120 = vunpack.c.l.b16 %v86
    %v121 = vunpack.c.l.b16 %v87
    %v122 = vunpack.c.l.b16 %v88
    %v123 = vunpack.c.l.b16 %v89
    %v124 = vunpack.c.l.b16 %v90
    %v125 = vunpack.c.l.b16 %v91
    %v126 = vunpack.c.l.b16 %v92
    %v127 = vunpack.c.l.b16 %v93
    %v128 = vunpack.c.l.b16 %v94
    %v129 = vunpack.c.l.b16 %v95
    %v130 = vunpack.c.l.b16 %v96
    %v131 = vunpack.c.l.b16 %v97
    %v132 = vunpack.c.l.b16 %v98
    %v133 = vpack.c.b16 %v118, %v117
    %v134 = vpack.c.b16 %v120, %v119
    %v135 = vpack.c.b16 %v122, %v121
    %v136 = vpack.c.b16 %v124, %v123
    %v137 = vpack.c.b16 %v126, %v125
    %v138 = vpack.c.b16 %v128, %v127
    %v139 = vpack.c.b16 %v130, %v129
    %v140 = vpack.c.b16 %v132, %v131
    %149 = vmatpush.bf16.msra.mxu0 %v140
    %150 = vmatpush.bf16.msra.mxu0 %v139
    %151 = vmatpush.bf16.msra.mxu0 %v138
    %152 = vmatpush.bf16.msra.mxu0 %v137
    %153 = vmatpush.bf16.msra.mxu0 %v136
    %154 = vmatpush.bf16.msra.mxu0 %v135
    %155 = vmatpush.bf16.msra.mxu0 %v134
    %156 = vmatpush.bf16.msra.mxu0 %v133
    %157 = vmatmul.bf16.gmra.mxu0 %v82
    %v158 = vpop.f32.mrf.mxu0
    %v159 = vadd.f32 %v100, %v158
    %v160 = vpop.f32.mrf.mxu0
    %161 = vdwg.mxu0
    %v162 = vmul.f32 %v159, 0.2
    %v163 = vmax.f32 %v159, %v162
    %v164 = vpack.c.bf16 %v163, %v163
    %s165 = scalar_lea.vmem [#allocation5], 64
    %v166 = vld [vmem:[%s165] sm:$0xf]
    %v167 = vld [vmem:[%s165 + $0x4] sm:$0xf]
    %v168 = vld [vmem:[%s165 + $0x8] sm:$0xf]
    %v169 = vld [vmem:[%s165 + $0xc] sm:$0xf]
    %v170 = vld [vmem:[%s165 + $0x10] sm:$0xf]
    %v171 = vld [vmem:[%s165 + $0x14] sm:$0xf]
    %v172 = vld [vmem:[%s165 + $0x18] sm:$0xf]
    %v173 = vld [vmem:[%s165 + $0x1c] sm:$0xf]
    %v174 = vld [vmem:[%s165 + $0x20] sm:$0xf]
    %v175 = vld [vmem:[%s165 + $0x24] sm:$0xf]
    %v176 = vld [vmem:[%s165 + $0x28] sm:$0xf]
    %v177 = vld [vmem:[%s165 + $0x2c] sm:$0xf]
    %v178 = vld [vmem:[%s165 + $0x30] sm:$0xf]
    %v179 = vld [vmem:[%s165 + $0x34] sm:$0xf]
    %v180 = vld [vmem:[%s165 + $0x38] sm:$0xf]
    %v181 = vld [vmem:[%s165 + $0x3c] sm:$0xf]
    %v182 = vld [vmem:[#allocation7 + $0x1] sm:$0x1]
    %v183 = vperm.slane %v182, 0
    %v200 = vunpack.c.l.b16 %v166
    %v201 = vunpack.c.l.b16 %v167
    %v202 = vunpack.c.l.b16 %v168
    %v203 = vunpack.c.l.b16 %v169
    %v204 = vunpack.c.l.b16 %v170
    %v205 = vunpack.c.l.b16 %v171
    %v206 = vunpack.c.l.b16 %v172
    %v207 = vunpack.c.l.b16 %v173
    %v208 = vunpack.c.l.b16 %v174
    %v209 = vunpack.c.l.b16 %v175
    %v210 = vunpack.c.l.b16 %v176
    %v211 = vunpack.c.l.b16 %v177
    %v212 = vunpack.c.l.b16 %v178
    %v213 = vunpack.c.l.b16 %v179
    %v214 = vunpack.c.l.b16 %v180
    %v215 = vunpack.c.l.b16 %v181
    %v216 = vpack.c.b16 %v201, %v200
    %v217 = vpack.c.b16 %v203, %v202
    %v218 = vpack.c.b16 %v205, %v204
    %v219 = vpack.c.b16 %v207, %v206
    %v220 = vpack.c.b16 %v209, %v208
    %v221 = vpack.c.b16 %v211, %v210
    %v222 = vpack.c.b16 %v213, %v212
    %v223 = vpack.c.b16 %v215, %v214
    %232 = vmatpush.bf16.msra.mxu0 %v223
    %233 = vmatpush.bf16.msra.mxu0 %v222
    %234 = vmatpush.bf16.msra.mxu0 %v221
    %235 = vmatpush.bf16.msra.mxu0 %v220
    %236 = vmatpush.bf16.msra.mxu0 %v219
    %237 = vmatpush.bf16.msra.mxu0 %v218
    %238 = vmatpush.bf16.msra.mxu0 %v217
    %239 = vmatpush.bf16.msra.mxu0 %v216
    %240 = vmatmul.bf16.gmra.mxu0 %v164
    %v241 = vpop.f32.mrf.mxu0
    %v242 = vadd.f32 %v183, %v241
    %v243 = vpop.f32.mrf.mxu0
    %244 = vdwg.mxu0
    %v245 = vmul.f32 %v242, 0.2
    %v246 = vmax.f32 %v242, %v245
    %v247 = vpack.c.bf16 %v246, %v246
    %s248 = scalar_lea.vmem [#allocation5], 128
    %v249 = vld [vmem:[%s248] sm:$0xf]
    %v250 = vld [vmem:[%s248 + $0x4] sm:$0xf]
    %v251 = vld [vmem:[%s248 + $0x8] sm:$0xf]
    %v252 = vld [vmem:[%s248 + $0xc] sm:$0xf]
    %v253 = vld [vmem:[%s248 + $0x10] sm:$0xf]
    %v254 = vld [vmem:[%s248 + $0x14] sm:$0xf]
    %v255 = vld [vmem:[%s248 + $0x18] sm:$0xf]
    %v256 = vld [vmem:[%s248 + $0x1c] sm:$0xf]
    %v257 = vld [vmem:[%s248 + $0x20] sm:$0xf]
    %v258 = vld [vmem:[%s248 + $0x24] sm:$0xf]
    %v259 = vld [vmem:[%s248 + $0x28] sm:$0xf]
    %v260 = vld [vmem:[%s248 + $0x2c] sm:$0xf]
    %v261 = vld [vmem:[%s248 + $0x30] sm:$0xf]
    %v262 = vld [vmem:[%s248 + $0x34] sm:$0xf]
    %v263 = vld [vmem:[%s248 + $0x38] sm:$0xf]
    %v264 = vld [vmem:[%s248 + $0x3c] sm:$0xf]
    %v265 = vld [vmem:[#allocation7 + $0x2] sm:$0x1]
    %v266 = vperm.slane %v265, 0
    %v283 = vunpack.c.l.b16 %v249
    %v284 = vunpack.c.l.b16 %v250
    %v285 = vunpack.c.l.b16 %v251
    %v286 = vunpack.c.l.b16 %v252
    %v287 = vunpack.c.l.b16 %v253
    %v288 = vunpack.c.l.b16 %v254
    %v289 = vunpack.c.l.b16 %v255
    %v290 = vunpack.c.l.b16 %v256
    %v291 = vunpack.c.l.b16 %v257
    %v292 = vunpack.c.l.b16 %v258
    %v293 = vunpack.c.l.b16 %v259
    %v294 = vunpack.c.l.b16 %v260
    %v295 = vunpack.c.l.b16 %v261
    %v296 = vunpack.c.l.b16 %v262
    %v297 = vunpack.c.l.b16 %v263
    %v298 = vunpack.c.l.b16 %v264
    %v299 = vpack.c.b16 %v284, %v283
    %v300 = vpack.c.b16 %v286, %v285
    %v301 = vpack.c.b16 %v288, %v287
    %v302 = vpack.c.b16 %v290, %v289
    %v303 = vpack.c.b16 %v292, %v291
    %v304 = vpack.c.b16 %v294, %v293
    %v305 = vpack.c.b16 %v296, %v295
    %v306 = vpack.c.b16 %v298, %v297
    %315 = vmatpush.bf16.msra.mxu0 %v306
    %316 = vmatpush.bf16.msra.mxu0 %v305
    %317 = vmatpush.bf16.msra.mxu0 %v304
    %318 = vmatpush.bf16.msra.mxu0 %v303
    %319 = vmatpush.bf16.msra.mxu0 %v302
    %320 = vmatpush.bf16.msra.mxu0 %v301
    %321 = vmatpush.bf16.msra.mxu0 %v300
    %322 = vmatpush.bf16.msra.mxu0 %v299
    %323 = vmatmul.bf16.gmra.mxu0 %v247
    %v324 = vpop.f32.mrf.mxu0
    %v325 = vadd.f32 %v266, %v324
    %v326 = vpop.f32.mrf.mxu0
    %327 = vdwg.mxu0
    %v328 = vmul.f32 %v325, 0.2
    %v329 = vmax.f32 %v325, %v328
    %v330 = vpack.c.bf16 %v329, %v329
    %s331 = scalar_lea.vmem [#allocation5], 192
    %v332 = vld [vmem:[%s331] sm:$0xf]
    %v333 = vld [vmem:[%s331 + $0x4] sm:$0xf]
    %v334 = vld [vmem:[%s331 + $0x8] sm:$0xf]
    %v335 = vld [vmem:[%s331 + $0xc] sm:$0xf]
    %v336 = vld [vmem:[%s331 + $0x10] sm:$0xf]
    %v337 = vld [vmem:[%s331 + $0x14] sm:$0xf]
    %v338 = vld [vmem:[%s331 + $0x18] sm:$0xf]
    %v339 = vld [vmem:[%s331 + $0x1c] sm:$0xf]
    %v340 = vld [vmem:[%s331 + $0x20] sm:$0xf]
    %v341 = vld [vmem:[%s331 + $0x24] sm:$0xf]
    %v342 = vld [vmem:[%s331 + $0x28] sm:$0xf]
    %v343 = vld [vmem:[%s331 + $0x2c] sm:$0xf]
    %v344 = vld [vmem:[%s331 + $0x30] sm:$0xf]
    %v345 = vld [vmem:[%s331 + $0x34] sm:$0xf]
    %v346 = vld [vmem:[%s331 + $0x38] sm:$0xf]
    %v347 = vld [vmem:[%s331 + $0x3c] sm:$0xf]
    %v348 = vld [vmem:[#allocation7 + $0x3] sm:$0x1]
    %v349 = vperm.slane %v348, 0
    %v366 = vunpack.c.l.b16 %v332
    %v367 = vunpack.c.l.b16 %v333
    %v368 = vunpack.c.l.b16 %v334
    %v369 = vunpack.c.l.b16 %v335
    %v370 = vunpack.c.l.b16 %v336
    %v371 = vunpack.c.l.b16 %v337
    %v372 = vunpack.c.l.b16 %v338
    %v373 = vunpack.c.l.b16 %v339
    %v374 = vunpack.c.l.b16 %v340
    %v375 = vunpack.c.l.b16 %v341
    %v376 = vunpack.c.l.b16 %v342
    %v377 = vunpack.c.l.b16 %v343
    %v378 = vunpack.c.l.b16 %v344
    %v379 = vunpack.c.l.b16 %v345
    %v380 = vunpack.c.l.b16 %v346
    %v381 = vunpack.c.l.b16 %v347
    %v382 = vpack.c.b16 %v367, %v366
    %v383 = vpack.c.b16 %v369, %v368
    %v384 = vpack.c.b16 %v371, %v370
    %v385 = vpack.c.b16 %v373, %v372
    %v386 = vpack.c.b16 %v375, %v374
    %v387 = vpack.c.b16 %v377, %v376
    %v388 = vpack.c.b16 %v379, %v378
    %v389 = vpack.c.b16 %v381, %v380
    %398 = vmatpush.bf16.msra.mxu0 %v389
    %399 = vmatpush.bf16.msra.mxu0 %v388
    %400 = vmatpush.bf16.msra.mxu0 %v387
    %401 = vmatpush.bf16.msra.mxu0 %v386
    %402 = vmatpush.bf16.msra.mxu0 %v385
    %403 = vmatpush.bf16.msra.mxu0 %v384
    %404 = vmatpush.bf16.msra.mxu0 %v383
    %405 = vmatpush.bf16.msra.mxu0 %v382
    %406 = vmatmul.bf16.gmra.mxu0 %v330
    %v407 = vpop.f32.mrf.mxu0
    %v408 = vadd.f32 %v349, %v407
    %v409 = vpop.f32.mrf.mxu0
    %410 = vdwg.mxu0
    %v411 = vmul.f32 %v408, 0.2
    %v412 = vmax.f32 %v408, %v411
    %413 = vst [vmem:[#allocation8] sm:$0xff] %v412
    // Predicated region
    $region26: #{tpu_custom_call.1} parent=1 // pred_check
      _
    $region27: #{tpu_custom_call.1} parent=1 // pred_check_branch
      %415 = sbr.rel (0) target = $region29
    $region28: #{tpu_custom_call.1} parent=1 // pred_region
      %417 = vsyncadd [#allocation4], 0
      %s419 = sshll.u32 [#allocation8], 4
      %s420 = int_to_ptr.vmem [resolvable:$true] %s419
      %s421 = sshll.u32 %s3, 4
      %s422 = int_to_ptr.hbm [resolvable:$true] %s421
      %424 = dma.vmem_to_hbm [thread:$0]  %s420, 128, %s422, [#allocation4]
    $region29: #{tpu_custom_call.1} parent=1 // pred_fallthru
      _
    // Predicated region
    $region30: #{tpu_custom_call.1} parent=1 // pred_check
      _
    $region31: #{tpu_custom_call.1} parent=1 // pred_check_branch
      %426 = sbr.rel (0) target = $region33
    $region32: #{tpu_custom_call.1} parent=1 // pred_region
      %428 = dma.done [#allocation4], 128
    $region33: #{tpu_custom_call.1} parent=1 // pred_fallthru
      _
    %429 = vsyncpa [#allocation3], 1
    %430 = vsyncpa [#allocation6], 1
    %431 = vsyncpa [#allocation4], 1

</llo_original>
